<compile_context>
chip_gen: v5e
topology: v5e:2x2
jax: 0.10.0
libtpu: 0.0.40
codegen_flags: <defaults>
</compile_context>

<pallas_src>
import functools

import jax
import jax.numpy as jnp
from jax import lax
from jax.experimental import pallas as pl
from jax.experimental.pallas import tpu as pltpu


def _ce_label_smooth_kernel(x_ref, tgt_ref, out_ref, acc_ref, *,
                            epsilon, num_classes, n_total, tile_n, n_inner):
    # x_ref:   (tile_n, C) logits tile (native dtype, cast to f32 in-kernel)
    # tgt_ref: (tile_n, 1) i32 class indices
    # out_ref: (1, 1) f32 SMEM partial sum for the current outer grid index
    # acc_ref: (tile_n, 1) f32 VMEM accumulator (persists across inner steps)
    o = pl.program_id(0)   # outer axis: "parallel" (megacore sharding on v7x)
    i = pl.program_id(1)   # inner axis: sequential reduction

    @pl.when(i == 0)
    def _init():
        acc_ref[...] = jnp.zeros_like(acc_ref)

    x = x_ref[...].astype(jnp.float32)                      # (tile_n, C)
    tn, c = x.shape

    # Stable log-softmax + single fused class-axis weighted reduction.
    # Using sum_c t[n,c] == 1:
    #   loss_n = lse_n - sum_c w[n,c] * shifted[n,c]
    #   w[n,c] = (1-eps)*[c == tgt_n] + eps/C
    row_max = jnp.max(x, axis=1, keepdims=True)
    shifted = x - row_max
    lse = jnp.log(jnp.sum(jnp.exp(shifted), axis=1, keepdims=True))   # (tn, 1)

    col_ids = lax.broadcasted_iota(jnp.int32, (tn, c), 1)
    tgt = tgt_ref[...]                                                # (tn, 1)
    lo = jnp.float32(epsilon / num_classes)
    hi = jnp.float32(1.0 - epsilon) + lo
    w = jnp.where(col_ids == tgt, hi, lo)
    weighted = jnp.sum(shifted * w, axis=1, keepdims=True)            # (tn, 1)

    loss_rows = lse - weighted                                        # (tn, 1)

    # Row-level validity mask only (no full-tile pre-mask on x): garbage in the
    # ragged last tile / clamped duplicate tiles stays row-confined and is
    # discarded by this select.
    lin = o * n_inner + i                                  # linear batch-tile index
    row_ids = lin * tile_n + lax.broadcasted_iota(jnp.int32, (tn, 1), 0)
    loss_rows = jnp.where(row_ids < n_total, loss_rows, 0.0)

    acc_ref[...] += loss_rows                              # pure VPU elementwise

    @pl.when(i == n_inner - 1)
    def _finalize():
        # Single cross-sublane reduce + vector->scalar handoff per outer index.
        out_ref[0, 0] = jnp.sum(acc_ref[...])


def _vmem_budget():
    """Chip-aware VMEM numbers: (working-set budget, vmem_limit_bytes)."""
    try:
        cap = int(pltpu.get_tpu_info().vmem_capacity_bytes)
    except Exception:
        cap = 64 * 1024 * 1024            # conservative fallback (v7x per-TC VMEM)
    vmem_limit = min(cap * 3 // 4, 96 * 1024 * 1024)
    work_budget = min(int(cap * 0.45), 48 * 1024 * 1024)
    return work_budget, vmem_limit


def _choose_tile_n(n, c, in_itemsize, work_budget):
    """Byte-targeted batch tile: multi-MiB logits block per pipeline buffer."""
    target_block_bytes = 8 * 1024 * 1024
    # Working set per row: double-buffered input block + ~3 live f32 (., C)
    # temporaries + a few lane-padded (., 1) row vectors (incl. the accumulator).
    per_row = 2 * c * in_itemsize + 3 * c * 4 + 6 * 128 * 4
    tile = min(target_block_bytes // max(c * in_itemsize, 1),
               work_budget // max(per_row, 1))
    tile = int(min(max(tile, 8), n))
    if tile >= n:
        return n                           # full batch: full-dim rule, no rounding
    return max(8, (tile // 8) * 8)         # (8, 128) sublane constraint


def cross_entropy_label_smooth(inputs, targets, num_classes, epsilon=0.1,
                               tile_n=None):
    """inputs: (N, C) float logits (f32 or bf16); targets: (N,) int class ids."""
    n, c = inputs.shape
    assert c == num_classes
    tgt2d = targets.astype(jnp.int32).reshape(n, 1)

    work_budget, vmem_limit = _vmem_budget()
    if tile_n is None:
        tile_n = _choose_tile_n(n, c, inputs.dtype.itemsize, work_budget)
    tile_n = int(min(tile_n, n))
    if tile_n < n:
        tile_n = max(8, (tile_n // 8) * 8)

    t_total = pl.cdiv(n, tile_n)                  # total batch tiles
    n_outer = 2 if t_total >= 2 else 1            # 2 TCs on v7x; no-op elsewhere
    n_inner = pl.cdiv(t_total, n_outer)
    last_block = t_total - 1

    def tile_map(o, i):
        # Clamp so grid points past the last real tile re-read it; their rows
        # are >= n and get masked to zero inside the kernel.
        return (jnp.minimum(o * n_inner + i, last_block), 0)

    kernel = functools.partial(
        _ce_label_smooth_kernel,
        epsilon=float(epsilon),
        num_classes=int(num_classes),
        n_total=int(n),
        tile_n=int(tile_n),
        n_inner=int(n_inner),
    )

    cost = pl.CostEstimate(
        flops=6 * n * c,
        transcendentals=n * c + n,
        bytes_accessed=n * c * inputs.dtype.itemsize + n * 4 + n_outer * 4,
    )

    partial = pl.pallas_call(
        kernel,
        out_shape=jax.ShapeDtypeStruct((n_outer, 1), jnp.float32),
        grid_spec=pltpu.PrefetchScalarGridSpec(
            num_scalar_prefetch=0,
            grid=(n_outer, n_inner),
            in_specs=[
                pl.BlockSpec((tile_n, c), tile_map),
                pl.BlockSpec((tile_n, 1), tile_map),
            ],
            out_specs=pl.BlockSpec((1, 1), lambda o, i: (o, 0),
                                   memory_space=pltpu.SMEM),
            scratch_shapes=[pltpu.VMEM((tile_n, 1), jnp.float32)],
        ),
        compiler_params=pltpu.CompilerParams(
            dimension_semantics=("parallel", "arbitrary"),
            vmem_limit_bytes=int(vmem_limit),
        ),
        cost_estimate=cost,
    )(inputs, tgt2d)

    # Final cross-core combine + normalization in the wrapper.
    return jnp.sum(partial) / jnp.float32(n)


if __name__ == "__main__":
    key = jax.random.PRNGKey(0)
    k1, k2, k3, k4, k5, k6 = jax.random.split(key, 6)
    eps = 0.1

    def ref_loss(logits, labels, num_classes, eps):
        lp = jax.nn.log_softmax(logits.astype(jnp.float32), axis=1)
        oh = jax.nn.one_hot(labels, num_classes, dtype=jnp.float32)
        t = (1.0 - eps) * oh + eps / num_classes
        return jnp.sum(jnp.mean(-t * lp, axis=0))

    # Case 1: small batch, auto tile (single tile, single outer index).
    batch, num_classes = 8, 128
    logits = jax.random.normal(k1, (batch, num_classes), dtype=jnp.float32)
    labels = jax.random.randint(k2, (batch,), 0, num_classes, dtype=jnp.int32)
    loss = jax.block_until_ready(
        cross_entropy_label_smooth(logits, labels, num_classes, epsilon=eps))
    ref = ref_loss(logits, labels, num_classes, eps)
    assert jnp.allclose(loss, ref, rtol=1e-5, atol=1e-5), (loss, ref)

    # Case 2: forced small tile -> 2-axis grid (parallel outer + arbitrary inner)
    # with a ragged last tile and a clamped duplicate tile (exercises masking
    # and the per-outer partial sums).
    batch2 = 20
    logits2 = jax.random.normal(k3, (batch2, num_classes), dtype=jnp.float32)
    labels2 = jax.random.randint(k4, (batch2,), 0, num_classes, dtype=jnp.int32)
    loss2 = jax.block_until_ready(
        cross_entropy_label_smooth(logits2, labels2, num_classes,
                                   epsilon=eps, tile_n=8))
    ref2 = ref_loss(logits2, labels2, num_classes, eps)
    assert jnp.allclose(loss2, ref2, rtol=1e-5, atol=1e-5), (loss2, ref2)

    # Case 3: bf16 logits enter the kernel in native dtype (cast in-kernel).
    batch3 = 16
    logits3 = jax.random.normal(k5, (batch3, num_classes), dtype=jnp.bfloat16)
    labels3 = jax.random.randint(k6, (batch3,), 0, num_classes, dtype=jnp.int32)
    loss3 = jax.block_until_ready(
        cross_entropy_label_smooth(logits3, labels3, num_classes, epsilon=eps))
    ref3 = ref_loss(logits3, labels3, num_classes, eps)
    assert jnp.allclose(loss3, ref3, rtol=1e-4, atol=1e-4), (loss3, ref3)

    print("KERNEL_OK")
</pallas_src>

<mosaic_0001>
module attributes {stable_mosaic.version = 11 : i64} {
  func.func @_ce_label_smooth_kernel(%arg0: i32, %arg1: i32, %arg2: memref<8x128xf32, #tpu.memory_space<vmem>>, %arg3: memref<8x1xi32, #tpu.memory_space<vmem>>, %arg4: memref<1x1xf32, #tpu.memory_space<smem>>, %arg5: memref<8x1xf32, #tpu.memory_space<vmem>>) attributes {dimension_semantics = [#tpu.dimension_semantics<parallel>, #tpu.dimension_semantics<arbitrary>], iteration_bounds = array<i64: 1, 1>, scalar_prefetch = 0 : i64, scratch_operands = 1 : i64, tpu.core_type = #tpu.core_type<tc>, window_params = [{transform_indices = @transform_0, window_bounds = array<i64: 8, 128>}, {transform_indices = @transform_1, window_bounds = array<i64: 8, 1>}, {transform_indices = @transform_2, window_bounds = array<i64: 1, 1>}]} {
    %c0_i32 = arith.constant 0 : i32
    %0 = arith.cmpi eq, %arg1, %c0_i32 : i32
    %1 = arith.extui %0 : i1 to i32
    %c0_i32_0 = arith.constant 0 : i32
    %2 = arith.cmpi ne, %1, %c0_i32_0 : i32
    scf.if %2 {
      %cst_17 = arith.constant 0.000000e+00 : f32
      %40 = vector.broadcast %cst_17 : f32 to vector<8x1xf32>
      %c0_18 = arith.constant 0 : index
      %c0_19 = arith.constant 0 : index
      %41 = vector.load %arg5[%c0_18, %c0_19] : memref<8x1xf32, #tpu.memory_space<vmem>>, vector<8x1xf32>
      tpu.vector_store %arg5[%c0_18, %c0_19], %40 {strides = array<i32>} : memref<8x1xf32, #tpu.memory_space<vmem>>, vector<8x1xf32>,
    } else {
    }
    %c0 = arith.constant 0 : index
    %c0_1 = arith.constant 0 : index
    %3 = vector.load %arg2[%c0, %c0_1] : memref<8x128xf32, #tpu.memory_space<vmem>>, vector<8x128xf32>
    %cst = arith.constant dense<0xFF800000> : vector<8xf32>
    %4 = vector.multi_reduction <maximumf>, %3, %cst [1] : vector<8x128xf32> to vector<8xf32>
    %5 = vector.shape_cast %4 : vector<8xf32> to vector<8x1xf32>
    %6 = vector.broadcast %5 : vector<8x1xf32> to vector<8x128xf32>
    %7 = arith.subf %3, %6 : vector<8x128xf32>
    %8 = math.exp %7 : vector<8x128xf32>
    %cst_2 = arith.constant dense<0.000000e+00> : vector<8xf32>
    %9 = vector.multi_reduction <add>, %8, %cst_2 [1] : vector<8x128xf32> to vector<8xf32>
    %10 = vector.shape_cast %9 : vector<8xf32> to vector<8x1xf32>
    %11 = math.log %10 : vector<8x1xf32>
    %12 = tpu.iota {dimensions = array<i32: 1>} : vector<8x128xi32>
    %c0_3 = arith.constant 0 : index
    %c0_4 = arith.constant 0 : index
    %13 = vector.load %arg3[%c0_3, %c0_4] : memref<8x1xi32, #tpu.memory_space<vmem>>, vector<8x1xi32>
    %cst_5 = arith.constant 0.899999976 : f32
    %cst_6 = arith.constant 7.812500e-04 : f32
    %14 = arith.addf %cst_5, %cst_6 : f32
    %15 = vector.broadcast %13 : vector<8x1xi32> to vector<8x128xi32>
    %16 = arith.cmpi eq, %12, %15 : vector<8x128xi32>
    %cst_7 = arith.constant 7.812500e-04 : f32
    %17 = vector.broadcast %14 : f32 to vector<8x128xf32>
    %18 = vector.broadcast %cst_7 : f32 to vector<8x128xf32>
    %19 = arith.select %16, %17, %18 : vector<8x128xi1>, vector<8x128xf32>
    %20 = arith.mulf %7, %19 : vector<8x128xf32>
    %cst_8 = arith.constant dense<0.000000e+00> : vector<8xf32>
    %21 = vector.multi_reduction <add>, %20, %cst_8 [1] : vector<8x128xf32> to vector<8xf32>
    %22 = vector.shape_cast %21 : vector<8xf32> to vector<8x1xf32>
    %23 = arith.subf %11, %22 : vector<8x1xf32>
    %c1_i32 = arith.constant 1 : i32
    %24 = arith.muli %arg0, %c1_i32 : i32
    %25 = arith.addi %24, %arg1 : i32
    %c8_i32 = arith.constant 8 : i32
    %26 = arith.muli %25, %c8_i32 : i32
    %27 = tpu.iota {dimensions = array<i32: 0>} : vector<8x1xi32>
    %28 = vector.broadcast %26 : i32 to vector<8x1xi32>
    %29 = arith.addi %28, %27 : vector<8x1xi32>
    %c8_i32_9 = arith.constant 8 : i32
    %30 = vector.broadcast %c8_i32_9 : i32 to vector<8x1xi32>
    %31 = arith.cmpi slt, %29, %30 : vector<8x1xi32>
    %cst_10 = arith.constant 0.000000e+00 : f32
    %32 = vector.broadcast %cst_10 : f32 to vector<8x1xf32>
    %33 = arith.select %31, %23, %32 : vector<8x1xi1>, vector<8x1xf32>
    %c0_11 = arith.constant 0 : index
    %c0_12 = arith.constant 0 : index
    %34 = vector.load %arg5[%c0_11, %c0_12] : memref<8x1xf32, #tpu.memory_space<vmem>>, vector<8x1xf32>
    %35 = arith.addf %34, %33 : vector<8x1xf32>
    %c0_13 = arith.constant 0 : index
    %c0_14 = arith.constant 0 : index
    %36 = vector.load %arg5[%c0_13, %c0_14] : memref<8x1xf32, #tpu.memory_space<vmem>>, vector<8x1xf32>
    tpu.vector_store %arg5[%c0_13, %c0_14], %35 {strides = array<i32>} : memref<8x1xf32, #tpu.memory_space<vmem>>, vector<8x1xf32>,
    %c0_i32_15 = arith.constant 0 : i32
    %37 = arith.cmpi eq, %arg1, %c0_i32_15 : i32
    %38 = arith.extui %37 : i1 to i32
    %c0_i32_16 = arith.constant 0 : i32
    %39 = arith.cmpi ne, %38, %c0_i32_16 : i32
    scf.if %39 {
      %c0_17 = arith.constant 0 : index
      %c0_18 = arith.constant 0 : index
      %40 = vector.load %arg5[%c0_17, %c0_18] : memref<8x1xf32, #tpu.memory_space<vmem>>, vector<8x1xf32>
      %41 = vector.shape_cast %40 : vector<8x1xf32> to vector<1x8x1xf32>
      %cst_19 = arith.constant dense<0.000000e+00> : vector<1xf32>
      %42 = vector.multi_reduction <add>, %41, %cst_19 [1, 2] : vector<1x8x1xf32> to vector<1xf32>
      %43 = vector.shape_cast %42 : vector<1xf32> to vector<1x1x1xf32>
      %44 = vector.extract %43[0, 0, 0] : f32 from vector<1x1x1xf32>
      %c0_20 = arith.constant 0 : index
      %c0_21 = arith.constant 0 : index
      %45 = memref.load %arg4[%c0_20, %c0_21] : memref<1x1xf32, #tpu.memory_space<smem>>
      memref.store %44, %arg4[%c0_20, %c0_21] : memref<1x1xf32, #tpu.memory_space<smem>>
    } else {
    }
    return
  }
  func.func @transform_0(%arg0: i32, %arg1: i32) -> (i32, i32) {
    %c1_i32 = arith.constant 1 : i32
    %0 = arith.muli %arg0, %c1_i32 : i32
    %1 = arith.addi %0, %arg1 : i32
    %c0_i32 = arith.constant 0 : i32
    %2 = arith.minsi %1, %c0_i32 : i32
    %c0_i32_0 = arith.constant 0 : i32
    %c0_i32_1 = arith.constant 0 : i32
    return %2, %c0_i32_0 : i32, i32
  }
  func.func @transform_1(%arg0: i32, %arg1: i32) -> (i32, i32) {
    %c1_i32 = arith.constant 1 : i32
    %0 = arith.muli %arg0, %c1_i32 : i32
    %1 = arith.addi %0, %arg1 : i32
    %c0_i32 = arith.constant 0 : i32
    %2 = arith.minsi %1, %c0_i32 : i32
    %c0_i32_0 = arith.constant 0 : i32
    %c0_i32_1 = arith.constant 0 : i32
    return %2, %c0_i32_0 : i32, i32
  }
  func.func @transform_2(%arg0: i32, %arg1: i32) -> (i32, i32) {
    %c0_i32 = arith.constant 0 : i32
    %c0_i32_0 = arith.constant 0 : i32
    return %arg0, %c0_i32 : i32, i32
  }
}

</mosaic_0001>

<llo_original>
// kernel: tpu_custom_call.1
$region0: #{tpu_custom_call.1}
  #allocation0 [shape = 'u32[]', space=smem, size = 0x4, offset = 0x4, fixed_abs, tag = 'smem constant byte address 0x4 - core index']
  #allocation1 [shape = 'u32[72,128]{1,0:T(1,128)}', space=vmem, size = 0x9000, scoped, tag = 'internal scratch']
  #allocation2 [shape = 'f32[8,1]{1,0:T(8,128)}', space=vmem, size = 0x1000, scoped, tag = 'scratch operand']
  %s0 = inlined_call_operand.vmem [shape: f32[8,128], index: 0, kind: input, shape index: {}]
  %s1 = inlined_call_operand.vmem [shape: s32[8,1], index: 1, kind: input, shape index: {}]
  %s2 = inlined_call_operand.hbm [shape: f32[1,1], index: 2, kind: output, shape index: {}]
  %s3 = sld [smem:[#allocation0]]
  $region26: #{tpu_custom_call.1} parent=0
    _
  %s5 = ssub.s32 1, %s3
  %s6 = scalar_select 0, %s5, %s3
  $region1: #{tpu_custom_call.1} parent=0
    #allocation3 [shape = 'u8[512]{0}', space=smem, size = 0x200, scoped, tag = 'output window, operand 0, single buffered']
    #allocation4 [shape = 's32[1]{0}', space=sflag, size = 0x4, scoped, tag = 'scoped memory for tpu_custom_call.1']
    %7 = vsyncpa [#allocation4], 0
    // Predicated region
    $region2: #{tpu_custom_call.1} parent=1 // pred_check
      _
    $region3: #{tpu_custom_call.1} parent=1 // pred_check_branch
      %9 = sbr.rel (0) target = $region5
    $region4: #{tpu_custom_call.1} parent=1 // pred_region
      %s10 = sadd.s32 0, 0
      %p11 = scmp.lt.s32.totalorder %s10, 0
      %s12 = scalar_select %p11, %s10, 0
      %p13 = scmp.lt.s32.totalorder %s12, 0
      %s14 = scalar_select %p13, %s12, 0
      %s15 = smul.addr %s14, 8
      %s16 = scalar_lea.vmem %s0, %s15
      %s17 = sadd.s32 0, 0
      %p18 = scmp.lt.s32.totalorder %s17, 0
      %s19 = scalar_select %p18, %s17, 0
    $region5: #{tpu_custom_call.1} parent=1 // pred_fallthru
      _
    // Predicated region
    $region6: #{tpu_custom_call.1} parent=1 // pred_check
      _
    $region7: #{tpu_custom_call.1} parent=1 // pred_check_branch
      %21 = sbr.rel (0) target = $region9
    $region8: #{tpu_custom_call.1} parent=1 // pred_region
      %s22 = sadd.s32 0, 0
      %p23 = scmp.lt.s32.totalorder %s22, 0
      %s24 = scalar_select %p23, %s22, 0
      %p25 = scmp.lt.s32.totalorder %s24, 0
      %s26 = scalar_select %p25, %s24, 0
      %s27 = smul.addr %s26, 8
      %s28 = scalar_lea.vmem %s1, %s27
      %s29 = sadd.s32 0, 0
      %p30 = scmp.lt.s32.totalorder %s29, 0
      %s31 = scalar_select %p30, %s29, 0
    $region9: #{tpu_custom_call.1} parent=1 // pred_fallthru
      _
    %s32 = sadd.s32 0, 0
    %p33 = scmp.lt.s32.totalorder %s32, 0
    %s34 = scalar_select %p33, %s32, 0
    %p35 = scmp.lt.s32.totalorder %s34, 0
    %s36 = scalar_select %p35, %s34, 0
    %s37 = smul.addr %s36, 8
    %s38 = scalar_lea.vmem %s0, %s37
    %s39 = sadd.s32 0, 0
    %p40 = scmp.lt.s32.totalorder %s39, 0
    %s41 = scalar_select %p40, %s39, 0
    %p42 = scmp.lt.s32.totalorder %s41, 0
    %s43 = scalar_select %p42, %s41, 0
    %s44 = smul.addr %s43, 8
    %s45 = scalar_lea.vmem %s1, %s44
    %s46 = sadd.s32 0, 0
    %p47 = scmp.lt.s32.totalorder %s46, 0
    %s48 = scalar_select %p47, %s46, 0
    %p49 = scmp.lt.s32.totalorder %s48, 0
    %s50 = scalar_select %p49, %s48, 0
    %s51 = smul.addr %s50, 8
    %s52 = scalar_lea.vmem %s0, %s51
    %s53 = sadd.s32 0, 0
    %p54 = scmp.lt.s32.totalorder %s53, 0
    %s55 = scalar_select %p54, %s53, 0
    %s56 = sadd.s32 0, 0
    %p57 = scmp.lt.s32.totalorder %s56, 0
    %s58 = scalar_select %p57, %s56, 0
    %p59 = scmp.lt.s32.totalorder %s58, 0
    %s60 = scalar_select %p59, %s58, 0
    %s61 = smul.addr %s60, 8
    %s62 = scalar_lea.vmem %s1, %s61
    %s63 = sadd.s32 0, 0
    %p64 = scmp.lt.s32.totalorder %s63, 0
    %s65 = scalar_select %p64, %s63, 0
    %p66 = scmp.eq.s32.totalorder 0, 0
    // Predicated region
    $region10: #{tpu_custom_call.1} parent=1 // pred_check
      %p67 = pneg %p66
    $region11: #{tpu_custom_call.1} parent=1 // pred_check_branch
      %69 = sbr.rel (%p67) target = $region13
    $region12: #{tpu_custom_call.1} parent=1 // pred_region
      %vm70 = vcmask 7168
      %71 = vst.msk [vmem:[#allocation2] sm:$0xff] %vm70, 0.0
    $region13: #{tpu_custom_call.1} parent=1 // pred_fallthru
      _
    %v72 = vld [vmem:[%s52] sm:$0xff]
    %73 = vmax.xlane.f32.xlu0 %v72
    %v74 = vpop.xlane.xlu0 %73
    %v75 = vsub.f32 %v72, %v74
    %v76 = vmul.f32 %v75, 1.442695
    %v77 = vpow.pop %v76
    %78 = vadd.xlane.f32.xlu0 %v77
    %v79 = vpop.xlane.xlu0 %78
    %v80 = vlog2.pop %v79
    %v81 = vmul.f32 %v80, 0.6931472
    %v82 = vlaneseq
    %v83 = vand.u32 %v82, 127
    %v84 = vld [vmem:[%s62] sm:$0xff]
    %85 = vset.pattern.permute.xlu0 0
    %86 = vperm.xlu0 %85, %v84
    %v87 = vpop.permute.xlu0 %86
    %vm88 = vcmp.eq.s32.totalorder %v83, %v87
    %v89 = vsel %vm88, 0.9007812, 0.00078125
    %v90 = vmul.f32 %v75, %v89
    %91 = vadd.xlane.f32.xlu0 %v90
    %v92 = vpop.xlane.xlu0 %91
    %v93 = vsub.f32 %v81, %v92
    %s94 = sadd.s32 0, 0
    %s95 = smul.u32 %s94, 8
    %v96 = vlaneseq
    %v97 = vshrl.u32 %v96, 7
    %v98 = vstv %s95
    %v99 = vadd.s32 %v98, %v97
    %vm100 = vcmp.lt.s32.totalorder %v99, 8
    %v101 = vsel %vm100, %v93, 0.0
    %v102 = vld [vmem:[#allocation2] sm:$0xff]
    %v103 = vadd.f32 %v102, %v101
    %vm104 = vcmask 7168
    %105 = vst.msk [vmem:[#allocation2] sm:$0xff] %vm104, %v103
    // Predicated region
    $region14: #{tpu_custom_call.1} parent=1 // pred_check
      %p106 = pneg %p66
    $region15: #{tpu_custom_call.1} parent=1 // pred_check_branch
      %108 = sbr.rel (%p106) target = $region17
    $region16: #{tpu_custom_call.1} parent=1 // pred_region
      %v109 = vld [vmem:[#allocation2] sm:$0xff]
      %v110 = vsel %vm104, %v109, 0.0
      %111 = vadd.xlane.f32.xlu0 %v110
      %v112 = vpop.xlane.xlu0 %111
      %v113 = vrot.slane %v112, 4
      %v114 = vadd.f32 %v112, %v113
      %v115 = vrot.slane %v114, 2
      %v116 = vadd.f32 %v114, %v115
      %v117 = vrot.slane %v116, 1
      %v118 = vadd.f32 %v116, %v117
      %s119 = vtos %v118
      %s120 = scalar_lea.smem [#allocation3], 0
      %121 = sst [smem:[%s120]] %s119
    $region17: #{tpu_custom_call.1} parent=1 // pred_fallthru
      _
    // Predicated region
    $region18: #{tpu_custom_call.1} parent=1 // pred_check
      _
    $region19: #{tpu_custom_call.1} parent=1 // pred_check_branch
      %123 = sbr.rel (0) target = $region21
    $region20: #{tpu_custom_call.1} parent=1 // pred_region
      %125 = vsyncadd [#allocation4], 0
      %s127 = sshll.u32 %s2, 4
      %s128 = int_to_ptr.hbm [resolvable:$true] %s127
      %130 = dma.smem_to_hbm [#allocation3], 16, %s128, [#allocation4]
    $region21: #{tpu_custom_call.1} parent=1 // pred_fallthru
      _
    // Predicated region
    $region22: #{tpu_custom_call.1} parent=1 // pred_check
      _
    $region23: #{tpu_custom_call.1} parent=1 // pred_check_branch
      %132 = sbr.rel (0) target = $region25
    $region24: #{tpu_custom_call.1} parent=1 // pred_region
      %134 = dma.done [#allocation4], 16
    $region25: #{tpu_custom_call.1} parent=1 // pred_fallthru
      _
    %135 = sfence
    %136 = vsyncpa [#allocation4], 1

</llo_original>
